<compile_context>
chip_gen: v5e
topology: v5e:2x2
jax: 0.10.0
libtpu: 0.0.40
codegen_flags: <defaults>
</compile_context>

<pallas_src>
import functools

import jax
import jax.numpy as jnp
from jax.experimental import pallas as pl
from jax.experimental.pallas import tpu as pltpu

_LANE = 128


def _round_up(x, m):
    return ((x + m - 1) // m) * m


def _sublane(itemsize):
    return {4: 8, 2: 16, 1: 32}.get(itemsize, 8)


def _vmem_caps():
    """(input_budget_bytes, vmem_limit_bytes) derived from this chip's VMEM."""
    try:
        cap = int(pltpu.get_tpu_info().vmem_capacity_bytes)
    except Exception:
        cap = 64 * 1024 * 1024  # conservative fallback (v7x per-TensorCore VMEM)
    # ~45% of physical for the 2-input x 2-pipeline-buffer working set:
    #   v5e/v6e (128 MiB) -> ~57 MiB, v7x (64 MiB) -> ~28 MiB.
    input_budget = int(cap * 0.45)
    # Raise the scoped-VMEM limit well above the defaults (v5e default: 16 MiB),
    # leaving headroom for the output blocks and Mosaic internal scratch.
    vmem_limit = int(cap * 0.85)
    return input_budget, vmem_limit


def _bytes_per_row(tile_d, itemsize):
    # 2 pipeline buffers x (2 inputs of tile_d cols + the (rows, 1) dummy column,
    # which the VMEM layout pads to a full 128-lane f32 row) + the single-buffered
    # (rows, 1) f32 d^2 scratch (also lane-padded).
    return 2 * (2 * tile_d * itemsize + _LANE * 4) + _LANE * 4


def _pick_tiles(b, d, itemsize, input_budget):
    sublane = _sublane(itemsize)

    # --- tile_d (lane axis) ---
    tile_d = d
    if _bytes_per_row(d, itemsize) * sublane > input_budget:
        # Even the minimum row tile with the full feature dim overflows the
        # budget (huge D): chunk D into lane-dense multiples of 128 and
        # accumulate d^2 across an inner "arbitrary" grid axis.
        max_cols = (input_budget // (2 * sublane) - _LANE * 4) // (2 * itemsize)
        tile_d = max((max_cols // _LANE) * _LANE, _LANE)
        tile_d = min(tile_d, _round_up(d, _LANE))

    # --- tile_b (batch axis) from the budget ---
    tile_b = input_budget // _bytes_per_row(tile_d, itemsize)
    tile_b = max((tile_b // sublane) * sublane, sublane)

    if b <= sublane:
        tile_b = b  # single full block (block == array dims is always legal)
    else:
        # Keep >= 2 grid steps (targeting 4) so both v7x TensorCores get work
        # and the BlockSpec pipeline overlaps DMA of tile i+1 with tile i.
        target_tiles = 4 if b >= 4 * sublane else 2
        split_cap = _round_up(-(-b // target_tiles), sublane)
        tile_b = max(min(tile_b, split_cap), sublane)
    return tile_b, tile_d


def _contrastive_kernel(f1_ref, f2_ref, dummy_ref, out_ref, dsq_ref, *,
                        margin, batch, dim, tile_b, tile_d, mask_rows, mask_cols):
    i = pl.program_id(0)
    j = pl.program_id(1)

    @pl.when(j == 0)
    def _():
        dsq_ref[...] = jnp.zeros_like(dsq_ref)

    # Subtract in the native dtype (bf16 VALU on v6e/v7x), single cast of the
    # diff to f32, then square-and-accumulate in f32.
    diff = (f1_ref[...] - f2_ref[...]).astype(jnp.float32)   # (tile_b, tile_d)
    if mask_cols:
        col = jax.lax.broadcasted_iota(jnp.int32, diff.shape, 1)
        diff = jnp.where(j * tile_d + col < dim, diff, 0.0)
    dsq_ref[...] += jnp.sum(diff * diff, axis=1, keepdims=True)

    @pl.when(j == pl.num_programs(1) - 1)
    def _():
        d_sq = dsq_ref[...]                                   # (tile_b, 1) f32
        dist = jnp.sqrt(d_sq)
        dummy = dummy_ref[...]                                # (tile_b, 1) f32
        hinge = jnp.maximum(margin - dist, 0.0)
        losses = 0.5 * d_sq * dummy + 0.5 * (1.0 - dummy) * (hinge * hinge)
        if mask_rows:
            row = jax.lax.broadcasted_iota(jnp.int32, losses.shape, 0)
            losses = jnp.where(i * tile_b + row < batch, losses, 0.0)
        partial = jnp.sum(losses)
        # Single full-block store: partial sum at [0, 0], zeros elsewhere.
        r = jax.lax.broadcasted_iota(jnp.int32, out_ref.shape, 0)
        c = jax.lax.broadcasted_iota(jnp.int32, out_ref.shape, 1)
        out_ref[...] = jnp.where((r == 0) & (c == 0), partial, 0.0)


def contrastive_loss(f1, f2, dummy, margin, *, tile_b=None, tile_d=None):
    """F1, F2: (B, D); dummy: (B,) of 0/1. Returns scalar mean contrastive loss."""
    assert f1.shape == f2.shape and f1.ndim == 2
    assert f1.dtype == f2.dtype
    b, d = f1.shape
    itemsize = jnp.dtype(f1.dtype).itemsize
    sublane = _sublane(itemsize)

    input_budget, vmem_limit = _vmem_caps()
    auto_tb, auto_td = _pick_tiles(b, d, itemsize, input_budget)
    if tile_b is None:
        tile_b = auto_tb
    if tile_d is None:
        tile_d = auto_td
    assert tile_b == b or tile_b % sublane == 0, (
        f"tile_b must be a multiple of {sublane} for dtype {f1.dtype} (or == B)")
    assert tile_d == d or tile_d % _LANE == 0, "tile_d must be a multiple of 128 (or == D)"

    num_b = -(-b // tile_b)
    num_d = -(-d // tile_d)
    mask_rows = (tile_b != b) and (b % tile_b != 0)
    mask_cols = (tile_d != d) and (d % tile_d != 0)

    # dummy travels as an f32 (B, 1) column so it blocks cleanly alongside F1/F2.
    dummy2d = jnp.asarray(dummy, dtype=jnp.float32).reshape(b, 1)

    # NOTE: for best HBM bandwidth, store embeddings with D a multiple of 128
    # (zero-padding extra columns does not change d^2).  We do not pad here:
    # that would cost an extra full HBM copy of a bandwidth-bound input.

    kernel = functools.partial(
        _contrastive_kernel, margin=float(margin), batch=b, dim=d,
        tile_b=tile_b, tile_d=tile_d, mask_rows=mask_rows, mask_cols=mask_cols)

    out = pl.pallas_call(
        kernel,
        out_shape=jax.ShapeDtypeStruct((num_b * 8, _LANE), jnp.float32),
        grid_spec=pltpu.PrefetchScalarGridSpec(
            num_scalar_prefetch=0,
            grid=(num_b, num_d),
            in_specs=[
                pl.BlockSpec((tile_b, tile_d), lambda i, j: (i, j)),
                pl.BlockSpec((tile_b, tile_d), lambda i, j: (i, j)),
                pl.BlockSpec((tile_b, 1), lambda i, j: (i, 0)),
            ],
            out_specs=pl.BlockSpec((8, _LANE), lambda i, j: (i, 0)),
            scratch_shapes=[pltpu.VMEM((tile_b, 1), jnp.float32)],
        ),
        compiler_params=pltpu.CompilerParams(
            # Batch tiles are independent (distinct output blocks) -> parallel
            # (megacore).  The D axis carries the d^2 accumulator -> arbitrary.
            dimension_semantics=("parallel", "arbitrary"),
            vmem_limit_bytes=vmem_limit,
        ),
        cost_estimate=pl.CostEstimate(
            flops=int(3 * b * d + 10 * b),
            transcendentals=int(b),
            bytes_accessed=int(2 * b * d * itemsize + b * 4 + num_b * 8 * _LANE * 4),
        ),
    )(f1, f2, dummy2d)

    # Tiny finalization: sum the per-tile partials, divide by the true B.
    return jnp.sum(out) / jnp.float32(b)


def _reference_loss(f1, f2, dummy, margin):
    f1 = f1.astype(jnp.float32)
    f2 = f2.astype(jnp.float32)
    d = jnp.sqrt(jnp.sum((f1 - f2) ** 2, axis=1))
    dummy = dummy.astype(jnp.float32)
    return jnp.mean(
        0.5 * d ** 2 * dummy + 0.5 * (1.0 - dummy) * jnp.maximum(margin - d, 0.0) ** 2
    )


if __name__ == "__main__":
    key = jax.random.PRNGKey(0)

    cases = [
        # (B, D, dtype, margin, tile_b, tile_d, tol)
        (8, 32, jnp.float32, 1.0, None, None, 1e-4),     # tiny: single full block
        (19, 40, jnp.float32, 0.7, 8, None, 1e-4),       # forced tiling: 3 B-tiles, masked rows
        (24, 128, jnp.bfloat16, 1.0, None, None, 2e-2),  # bf16: auto 2-way split (bf16 diff)
        (16, 200, jnp.float32, 1.2, 8, 128, 1e-4),       # forced D chunking, masked partial D
    ]

    for (b, d, dtype, margin, tb, td, tol) in cases:
        key, k1, k2, k3 = jax.random.split(key, 4)
        f1 = jax.random.normal(k1, (b, d), dtype=jnp.float32).astype(dtype)
        f2 = jax.random.normal(k2, (b, d), dtype=jnp.float32).astype(dtype)
        dummy = (jax.random.uniform(k3, (b,)) > 0.5).astype(jnp.float32)

        loss = contrastive_loss(f1, f2, dummy, margin, tile_b=tb, tile_d=td)
        loss = jax.block_until_ready(loss)

        ref = _reference_loss(f1, f2, dummy, margin)
        assert jnp.allclose(loss, ref, rtol=tol, atol=tol), (b, d, str(dtype), loss, ref)

    print("KERNEL_OK")
</pallas_src>

<mosaic_0001>
module attributes {stable_mosaic.version = 11 : i64} {
  func.func @_contrastive_kernel(%arg0: i32, %arg1: i32, %arg2: memref<8x32xf32, #tpu.memory_space<vmem>>, %arg3: memref<8x32xf32, #tpu.memory_space<vmem>>, %arg4: memref<8x1xf32, #tpu.memory_space<vmem>>, %arg5: memref<8x128xf32, #tpu.memory_space<vmem>>, %arg6: memref<8x1xf32, #tpu.memory_space<vmem>>) attributes {dimension_semantics = [#tpu.dimension_semantics<parallel>, #tpu.dimension_semantics<arbitrary>], iteration_bounds = array<i64: 1, 1>, scalar_prefetch = 0 : i64, scratch_operands = 1 : i64, tpu.core_type = #tpu.core_type<tc>, window_params = [{transform_indices = @transform_0, window_bounds = array<i64: 8, 32>}, {transform_indices = @transform_1, window_bounds = array<i64: 8, 32>}, {transform_indices = @transform_2, window_bounds = array<i64: 8, 1>}, {transform_indices = @transform_3, window_bounds = array<i64: 8, 128>}]} {
    %c0_i32 = arith.constant 0 : i32
    %0 = arith.cmpi eq, %arg1, %c0_i32 : i32
    %1 = arith.extui %0 : i1 to i32
    %c0_i32_0 = arith.constant 0 : i32
    %2 = arith.cmpi ne, %1, %c0_i32_0 : i32
    scf.if %2 {
      %cst_10 = arith.constant 0.000000e+00 : f32
      %15 = vector.broadcast %cst_10 : f32 to vector<8x1xf32>
      %c0_11 = arith.constant 0 : index
      %c0_12 = arith.constant 0 : index
      %16 = vector.load %arg6[%c0_11, %c0_12] : memref<8x1xf32, #tpu.memory_space<vmem>>, vector<8x1xf32>
      tpu.vector_store %arg6[%c0_11, %c0_12], %15 {strides = array<i32>} : memref<8x1xf32, #tpu.memory_space<vmem>>, vector<8x1xf32>,
    } else {
    }
    %c0 = arith.constant 0 : index
    %c0_1 = arith.constant 0 : index
    %3 = vector.load %arg2[%c0, %c0_1] : memref<8x32xf32, #tpu.memory_space<vmem>>, vector<8x32xf32>
    %c0_2 = arith.constant 0 : index
    %c0_3 = arith.constant 0 : index
    %4 = vector.load %arg3[%c0_2, %c0_3] : memref<8x32xf32, #tpu.memory_space<vmem>>, vector<8x32xf32>
    %5 = arith.subf %3, %4 : vector<8x32xf32>
    %c0_4 = arith.constant 0 : index
    %c0_5 = arith.constant 0 : index
    %6 = vector.load %arg6[%c0_4, %c0_5] : memref<8x1xf32, #tpu.memory_space<vmem>>, vector<8x1xf32>
    %7 = arith.mulf %5, %5 : vector<8x32xf32>
    %cst = arith.constant dense<0.000000e+00> : vector<8xf32>
    %8 = vector.multi_reduction <add>, %7, %cst [1] : vector<8x32xf32> to vector<8xf32>
    %9 = vector.shape_cast %8 : vector<8xf32> to vector<8x1xf32>
    %10 = arith.addf %6, %9 : vector<8x1xf32>
    %c0_6 = arith.constant 0 : index
    %c0_7 = arith.constant 0 : index
    %11 = vector.load %arg6[%c0_6, %c0_7] : memref<8x1xf32, #tpu.memory_space<vmem>>, vector<8x1xf32>
    tpu.vector_store %arg6[%c0_6, %c0_7], %10 {strides = array<i32>} : memref<8x1xf32, #tpu.memory_space<vmem>>, vector<8x1xf32>,
    %c0_i32_8 = arith.constant 0 : i32
    %12 = arith.cmpi eq, %arg1, %c0_i32_8 : i32
    %13 = arith.extui %12 : i1 to i32
    %c0_i32_9 = arith.constant 0 : i32
    %14 = arith.cmpi ne, %13, %c0_i32_9 : i32
    scf.if %14 {
      %c0_10 = arith.constant 0 : index
      %c0_11 = arith.constant 0 : index
      %15 = vector.load %arg6[%c0_10, %c0_11] : memref<8x1xf32, #tpu.memory_space<vmem>>, vector<8x1xf32>
      %16 = math.sqrt %15 : vector<8x1xf32>
      %c0_12 = arith.constant 0 : index
      %c0_13 = arith.constant 0 : index
      %17 = vector.load %arg4[%c0_12, %c0_13] : memref<8x1xf32, #tpu.memory_space<vmem>>, vector<8x1xf32>
      %cst_14 = arith.constant 1.000000e+00 : f32
      %18 = vector.broadcast %cst_14 : f32 to vector<8x1xf32>
      %19 = arith.subf %18, %16 : vector<8x1xf32>
      %cst_15 = arith.constant 0.000000e+00 : f32
      %20 = vector.broadcast %cst_15 : f32 to vector<8x1xf32>
      %21 = arith.maximumf %19, %20 : vector<8x1xf32>
      %cst_16 = arith.constant 5.000000e-01 : f32
      %22 = vector.broadcast %cst_16 : f32 to vector<8x1xf32>
      %23 = arith.mulf %22, %15 : vector<8x1xf32>
      %24 = arith.mulf %23, %17 : vector<8x1xf32>
      %cst_17 = arith.constant 1.000000e+00 : f32
      %25 = vector.broadcast %cst_17 : f32 to vector<8x1xf32>
      %26 = arith.subf %25, %17 : vector<8x1xf32>
      %cst_18 = arith.constant 5.000000e-01 : f32
      %27 = vector.broadcast %cst_18 : f32 to vector<8x1xf32>
      %28 = arith.mulf %27, %26 : vector<8x1xf32>
      %29 = arith.mulf %21, %21 : vector<8x1xf32>
      %30 = arith.mulf %28, %29 : vector<8x1xf32>
      %31 = arith.addf %24, %30 : vector<8x1xf32>
      %32 = vector.shape_cast %31 : vector<8x1xf32> to vector<1x8x1xf32>
      %cst_19 = arith.constant dense<0.000000e+00> : vector<1xf32>
      %33 = vector.multi_reduction <add>, %32, %cst_19 [1, 2] : vector<1x8x1xf32> to vector<1xf32>
      %34 = vector.shape_cast %33 : vector<1xf32> to vector<1x1x1xf32>
      %35 = vector.extract %34[0, 0, 0] : f32 from vector<1x1x1xf32>
      %36 = tpu.iota {dimensions = array<i32: 0>} : vector<8x128xi32>
      %37 = tpu.iota {dimensions = array<i32: 1>} : vector<8x128xi32>
      %c0_i32_20 = arith.constant 0 : i32
      %38 = vector.broadcast %c0_i32_20 : i32 to vector<8x128xi32>
      %39 = arith.cmpi eq, %36, %38 : vector<8x128xi32>
      %c0_i32_21 = arith.constant 0 : i32
      %40 = vector.broadcast %c0_i32_21 : i32 to vector<8x128xi32>
      %41 = arith.cmpi eq, %37, %40 : vector<8x128xi32>
      %42 = arith.andi %39, %41 : vector<8x128xi1>
      %cst_22 = arith.constant 0.000000e+00 : f32
      %43 = vector.broadcast %35 : f32 to vector<8x128xf32>
      %44 = vector.broadcast %cst_22 : f32 to vector<8x128xf32>
      %45 = arith.select %42, %43, %44 : vector<8x128xi1>, vector<8x128xf32>
      %c0_23 = arith.constant 0 : index
      %c0_24 = arith.constant 0 : index
      %46 = vector.load %arg5[%c0_23, %c0_24] : memref<8x128xf32, #tpu.memory_space<vmem>>, vector<8x128xf32>
      tpu.vector_store %arg5[%c0_23, %c0_24], %45 {strides = array<i32>} : memref<8x128xf32, #tpu.memory_space<vmem>>, vector<8x128xf32>,
    } else {
    }
    return
  }
  func.func @transform_0(%arg0: i32, %arg1: i32) -> (i32, i32) {
    %c0_i32 = arith.constant 0 : i32
    return %arg0, %arg1 : i32, i32
  }
  func.func @transform_1(%arg0: i32, %arg1: i32) -> (i32, i32) {
    %c0_i32 = arith.constant 0 : i32
    return %arg0, %arg1 : i32, i32
  }
  func.func @transform_2(%arg0: i32, %arg1: i32) -> (i32, i32) {
    %c0_i32 = arith.constant 0 : i32
    %c0_i32_0 = arith.constant 0 : i32
    return %arg0, %c0_i32 : i32, i32
  }
  func.func @transform_3(%arg0: i32, %arg1: i32) -> (i32, i32) {
    %c0_i32 = arith.constant 0 : i32
    %c0_i32_0 = arith.constant 0 : i32
    return %arg0, %c0_i32 : i32, i32
  }
}

</mosaic_0001>

<llo_original>
// kernel: tpu_custom_call.1
$region0: #{tpu_custom_call.1}
  #allocation0 [shape = 'u32[]', space=smem, size = 0x4, offset = 0x4, fixed_abs, tag = 'smem constant byte address 0x4 - core index']
  #allocation1 [shape = 'u32[72,128]{1,0:T(1,128)}', space=vmem, size = 0x9000, scoped, tag = 'internal scratch']
  #allocation2 [shape = 'f32[8,1]{1,0:T(8,128)}', space=vmem, size = 0x1000, scoped, tag = 'scratch operand']
  %s0 = inlined_call_operand.vmem [shape: f32[8,32], index: 0, kind: input, shape index: {}]
  %s1 = inlined_call_operand.hbm [shape: f32[8,32], index: 1, kind: input, shape index: {}]
  %s2 = inlined_call_operand.vmem [shape: f32[8,1], index: 2, kind: input, shape index: {}]
  %s3 = inlined_call_operand.hbm [shape: f32[8,128], index: 3, kind: output, shape index: {}]
  %s4 = sld [smem:[#allocation0]]
  $region34: #{tpu_custom_call.1} parent=0
    _
  %s6 = ssub.s32 1, %s4
  %s7 = scalar_select 0, %s6, %s4
  $region1: #{tpu_custom_call.1} parent=0
    #allocation3 [shape = 'u8[4096]{0}', space=vmem, size = 0x1000, scoped, tag = 'input window, operand 1, single buffered']
    #allocation4 [shape = 's32[1]{0}', space=sflag, size = 0x4, scoped, tag = 'scoped memory for tpu_custom_call.1']
    #allocation5 [shape = 's32[1]{0}', space=sflag, size = 0x4, scoped, tag = 'scoped memory for tpu_custom_call.1']
    #allocation6 [shape = 'u8[4096]{0}', space=vmem, size = 0x1000, scoped, tag = 'output window, operand 0, single buffered']
    %8 = vsyncpa [#allocation4], 0
    %9 = vsyncpa [#allocation5], 0
    // Predicated region
    $region2: #{tpu_custom_call.1} parent=1 // pred_check
      _
    $region3: #{tpu_custom_call.1} parent=1 // pred_check_branch
      %11 = sbr.rel (0) target = $region5
    $region4: #{tpu_custom_call.1} parent=1 // pred_region
      _
    $region5: #{tpu_custom_call.1} parent=1 // pred_fallthru
      _
    // Predicated region
    $region6: #{tpu_custom_call.1} parent=1 // pred_check
      _
    $region7: #{tpu_custom_call.1} parent=1 // pred_check_branch
      %13 = sbr.rel (0) target = $region9
    $region8: #{tpu_custom_call.1} parent=1 // pred_region
      %15 = vsyncadd [#allocation4], 0
      %s17 = sshll.u32 %s1, 4
      %s18 = int_to_ptr.hbm [resolvable:$true] %s17
      %s19 = sshll.u32 [#allocation3], 4
      %s20 = int_to_ptr.vmem [resolvable:$true] %s19
      %22 = dma.hbm_to_vmem [thread:$0]  %s18, 128, %s20, [#allocation4]
    $region9: #{tpu_custom_call.1} parent=1 // pred_fallthru
      _
    // Predicated region
    $region10: #{tpu_custom_call.1} parent=1 // pred_check
      _
    $region11: #{tpu_custom_call.1} parent=1 // pred_check_branch
      %24 = sbr.rel (0) target = $region13
    $region12: #{tpu_custom_call.1} parent=1 // pred_region
      _
    $region13: #{tpu_custom_call.1} parent=1 // pred_fallthru
      _
    // Predicated region
    $region14: #{tpu_custom_call.1} parent=1 // pred_check
      _
    $region15: #{tpu_custom_call.1} parent=1 // pred_check_branch
      %26 = sbr.rel (0) target = $region17
    $region16: #{tpu_custom_call.1} parent=1 // pred_region
      %28 = dma.done [#allocation4], 128
    $region17: #{tpu_custom_call.1} parent=1 // pred_fallthru
      _
    %p29 = scmp.eq.s32.totalorder 0, 0
    // Predicated region
    $region18: #{tpu_custom_call.1} parent=1 // pred_check
      %p30 = pneg %p29
    $region19: #{tpu_custom_call.1} parent=1 // pred_check_branch
      %32 = sbr.rel (%p30) target = $region21
    $region20: #{tpu_custom_call.1} parent=1 // pred_region
      %vm33 = vcmask 7168
      %34 = vst.msk [vmem:[#allocation2] sm:$0xff] %vm33, 0.0
    $region21: #{tpu_custom_call.1} parent=1 // pred_fallthru
      _
    %v35 = vld [vmem:[%s0] sm:$0xff]
    %v36 = vld [vmem:[#allocation3] sm:$0xff]
    %v37 = vsub.f32 %v35, %v36
    %v38 = vld [vmem:[#allocation2] sm:$0xff]
    %v39 = vmul.f32 %v37, %v37
    %vm40 = vcmask 261120
    %v41 = vsel %vm40, %v39, 0.0
    %42 = vadd.xlane.f32.xlu0 %v41
    %v43 = vpop.xlane.xlu0 %42
    %v44 = vadd.f32 %v38, %v43
    %vm45 = vcmask 7168
    %46 = vst.msk [vmem:[#allocation2] sm:$0xff] %vm45, %v44
    // Predicated region
    $region22: #{tpu_custom_call.1} parent=1 // pred_check
      %p47 = pneg %p29
    $region23: #{tpu_custom_call.1} parent=1 // pred_check_branch
      %49 = sbr.rel (%p47) target = $region25
    $region24: #{tpu_custom_call.1} parent=1 // pred_region
      %v50 = vld [vmem:[#allocation2] sm:$0xff]
      %v51 = vrsqrt.pop %v50
      %v52 = vmul.f32 %v51, %v50
      %v53 = vmul.f32 %v52, %v51
      %v54 = vmul.f32 0.5, %v53
      %v55 = vsub.f32 1.5, %v54
      %v56 = vmul.f32 %v51, %v55
      %v57 = vmul.f32 %v50, %v56
      %vm58 = vcmp.eq.f32.partialorder %v50, inf
      %v59 = vsel %vm58, %v50, %v57
      %vm60 = vcmp.eq.f32.partialorder %v50, 0.0
      %v61 = vand.u32 %v50, 2147483648
      %v62 = vsel %vm60, %v61, %v59
      %v63 = vld [vmem:[%s2] sm:$0xff]
      %v64 = vsub.f32 1.0, %v62
      %v65 = vmax.f32 %v64, 0.0
      %v66 = vmul.f32 %v50, 0.5
      %v67 = vmul.f32 %v66, %v63
      %v68 = vsub.f32 1.0, %v63
      %v69 = vmul.f32 %v68, 0.5
      %v70 = vmul.f32 %v65, %v65
      %v71 = vmul.f32 %v69, %v70
      %v72 = vadd.f32 %v67, %v71
      %v73 = vsel %vm45, %v72, 0.0
      %74 = vadd.xlane.f32.xlu0 %v73
      %v75 = vpop.xlane.xlu0 %74
      %v76 = vrot.slane %v75, 4
      %v77 = vadd.f32 %v75, %v76
      %v78 = vrot.slane %v77, 2
      %v79 = vadd.f32 %v77, %v78
      %v80 = vrot.slane %v79, 1
      %v81 = vadd.f32 %v79, %v80
      %s82 = vtos %v81
      %v83 = vlaneseq
      %v84 = vshrl.u32 %v83, 7
      %v85 = vlaneseq
      %v86 = vand.u32 %v85, 127
      %vm87 = vcmp.eq.s32.totalorder %v84, 0
      %vm88 = vcmp.eq.s32.totalorder %v86, 0
      %vm89 = vmand %vm87, %vm88
      %v90 = vstv %s82
      %v91 = vsel %vm89, %v90, 0.0
      %92 = vst [vmem:[#allocation6] sm:$0xff] %v91
    $region25: #{tpu_custom_call.1} parent=1 // pred_fallthru
      _
    // Predicated region
    $region26: #{tpu_custom_call.1} parent=1 // pred_check
      _
    $region27: #{tpu_custom_call.1} parent=1 // pred_check_branch
      %94 = sbr.rel (0) target = $region29
    $region28: #{tpu_custom_call.1} parent=1 // pred_region
      %96 = vsyncadd [#allocation5], 0
      %s98 = sshll.u32 [#allocation6], 4
      %s99 = int_to_ptr.vmem [resolvable:$true] %s98
      %s100 = sshll.u32 %s3, 4
      %s101 = int_to_ptr.hbm [resolvable:$true] %s100
      %103 = dma.vmem_to_hbm [thread:$0]  %s99, 128, %s101, [#allocation5]
    $region29: #{tpu_custom_call.1} parent=1 // pred_fallthru
      _
    // Predicated region
    $region30: #{tpu_custom_call.1} parent=1 // pred_check
      _
    $region31: #{tpu_custom_call.1} parent=1 // pred_check_branch
      %105 = sbr.rel (0) target = $region33
    $region32: #{tpu_custom_call.1} parent=1 // pred_region
      %107 = dma.done [#allocation5], 128
    $region33: #{tpu_custom_call.1} parent=1 // pred_fallthru
      _
    %108 = vsyncpa [#allocation4], 1
    %109 = vsyncpa [#allocation5], 1

</llo_original>
